<compile_context>
chip_gen: v6e
topology: v6e:2x2x1
jax: 0.10.0
libtpu: 0.0.40
codegen_flags: <defaults>
</compile_context>

<pallas_src>
import functools

import jax
import jax.numpy as jnp
from jax.experimental import pallas as pl
from jax.experimental.pallas import tpu as pltpu

_MIB = 1024 * 1024


def _tpu_params():
    """Return (physical VMEM bytes, max Lq-tile) for the local TPU generation."""
    try:
        kind = jax.devices()[0].device_kind.lower()
    except Exception:
        kind = ""
    if "v5 lite" in kind or "v5e" in kind:
        return 128 * _MIB, 128          # v5e: 128 MiB VMEM, 128x128 MXU
    if "v6" in kind:
        return 128 * _MIB, 512          # v6e: 128 MiB VMEM, big tiles pay off
    if "v4" in kind or "v5" in kind:
        return 128 * _MIB, 256
    return 64 * _MIB, 256               # v7x / unknown: conservative 64 MiB


# --------------------------------------------------------------------------
# Kernel 1: full-Lk softmax per step (needed when the attn matrix is returned,
#           or when Lk is small enough that K/V fit comfortably in VMEM).
# --------------------------------------------------------------------------
def _attention_kernel(*refs, inv_temperature, has_mask, return_attn):
    it = iter(refs)
    q_ref, k_ref, v_ref = next(it), next(it), next(it)
    mask_ref = next(it) if has_mask else None
    out_ref = next(it)
    attn_ref = next(it) if return_attn else None

    # Pre-scale q once (O(TQ*D) muls) instead of dividing the (TQ, Lk) scores.
    q = q_ref[...] * inv_temperature                      # (TQ, D), native dtype
    scores = jax.lax.dot_general(                         # MXU, f32 accumulate
        q, k_ref[...], (((1,), (1,)), ((), ())),
        preferred_element_type=jnp.float32)               # (TQ, Lk)

    if has_mask:
        # masked_fill(mask, -inf); mask block is (TQ|1, Lk) and broadcasts here.
        scores = jnp.where(mask_ref[...] != 0, -jnp.inf, scores)

    smax = jnp.max(scores, axis=-1, keepdims=True)
    p = jnp.exp(scores - smax)                            # fully-masked row -> NaN (PyTorch)
    denom = jnp.sum(p, axis=-1, keepdims=True)
    attn = p * pl.reciprocal(denom, approx=True)          # EUP vrcp (own VLIW slot)

    out = jnp.dot(attn.astype(v_ref.dtype), v_ref[...],
                  preferred_element_type=jnp.float32)
    out_ref[...] = out.astype(out_ref.dtype)
    if return_attn:
        attn_ref[...] = attn.astype(attn_ref.dtype)


# --------------------------------------------------------------------------
# Kernel 2: Lk-tiled flash-style online softmax (attn matrix not produced).
# Grid: (B, Lq//TQ, Lk//TK), last axis "arbitrary".
# --------------------------------------------------------------------------
def _flash_attention_kernel(*refs, inv_temperature, has_mask):
    it = iter(refs)
    q_ref, k_ref, v_ref = next(it), next(it), next(it)
    mask_ref = next(it) if has_mask else None
    out_ref = next(it)
    m_sc, l_sc, acc_sc = next(it), next(it), next(it)

    kv = pl.program_id(2)

    @pl.when(kv == 0)
    def _():
        m_sc[...] = jnp.full_like(m_sc, -jnp.inf)
        l_sc[...] = jnp.zeros_like(l_sc)
        acc_sc[...] = jnp.zeros_like(acc_sc)

    q = q_ref[...] * inv_temperature                      # (TQ, D)
    s = jax.lax.dot_general(                              # (TQ, TK) f32
        q, k_ref[...], (((1,), (1,)), ((), ())),
        preferred_element_type=jnp.float32)

    if has_mask:
        s = jnp.where(mask_ref[...] != 0, -jnp.inf, s)

    m_prev = m_sc[...]
    m_new = jnp.maximum(m_prev, jnp.max(s, axis=-1, keepdims=True))
    if has_mask:
        # Guards keep -inf rows/tiles from turning into NaN mid-stream while
        # preserving the NaN output for rows that are masked at every key.
        alpha = jnp.where(m_new == -jnp.inf, 0.0, jnp.exp(m_prev - m_new))
        p = jnp.where(s == -jnp.inf, 0.0, jnp.exp(s - m_new))
    else:
        alpha = jnp.exp(m_prev - m_new)
        p = jnp.exp(s - m_new)

    l_sc[...] = alpha * l_sc[...] + jnp.sum(p, axis=-1, keepdims=True)
    acc_sc[...] = alpha * acc_sc[...] + jnp.dot(
        p.astype(v_ref.dtype), v_ref[...], preferred_element_type=jnp.float32)
    m_sc[...] = m_new

    @pl.when(kv == pl.num_programs(2) - 1)
    def _():
        # Exact divide in the once-per-tile epilogue (keeps l==0 -> NaN semantics).
        out_ref[...] = (acc_sc[...] / l_sc[...]).astype(out_ref.dtype)


# --------------------------------------------------------------------------
# Wrapper
# --------------------------------------------------------------------------
def cross_attention(q, k, v, mask=None, *, temperature=1.0, attn_dropout=0.0,
                    return_attn=True, attn_dtype=None):
    """Pallas equivalent of CrossAttention.forward (eval-mode dropout).

    Returns (output, attn) when return_attn=True, else (output, None).
    """
    del attn_dropout  # identity in eval / p == 0
    B, Lq, D = q.shape
    _, Lk, _ = k.shape
    Dv = v.shape[-1]
    has_mask = mask is not None
    attn_dtype = jnp.dtype(attn_dtype) if attn_dtype is not None else jnp.dtype(q.dtype)
    itemsize = jnp.dtype(q.dtype).itemsize
    a_itemsize = attn_dtype.itemsize

    if has_mask:
        mask = jnp.asarray(mask)
        if mask.ndim == 2:                       # (B, Lk) key-padding convenience
            mask = mask[:, None, :]
        mask = mask.astype(jnp.int8)             # NOT broadcast to (B, Lq, Lk)
        m_b, m_q, m_k = mask.shape
        assert m_k == Lk and m_b in (1, B) and m_q in (1, Lq), "bad mask shape"
    else:
        m_b = m_q = 1

    vmem_cap, tq_cap = _tpu_params()
    budget = vmem_cap // 2                       # headroom for temps the model misses
    vmem_limit = int(vmem_cap * 0.85)

    def _pick_tq(fixed_bytes, per_row_bytes):
        avail = max(budget - fixed_bytes, 0)
        max_tq = avail // max(per_row_bytes, 1)
        cands = [c for c in (512, 256, 128, 64, 32, 16, 8)
                 if c <= tq_cap and Lq % c == 0]
        for cand in cands:
            if cand <= max_tq:
                return cand
        return cands[-1] if cands else Lq        # best effort for awkward shapes

    inv_t = 1.0 / float(temperature)

    # Fixed (TQ-independent) per-step VMEM of the single-pass path: double-buffered
    # K and V blocks (+ broadcastable mask row).
    fixed_sp = 2 * Lk * (D + Dv) * itemsize + (2 * Lk if (has_mask and m_q == 1) else 0)
    tk_cands = [c for c in (512, 256, 128) if Lk % c == 0]
    use_flash = (not return_attn) and bool(tk_cands) and (Lk >= 2048 or fixed_sp > budget)

    if not use_flash:
        # Per-Lq-row bytes: q/out blocks (x2 dbl-buf), f32 scores/p/attn temporaries,
        # attn output block, full-rank mask block.
        per_row = 2 * (D + Dv) * itemsize + 3 * Lk * 4
        if return_attn:
            per_row += 2 * Lk * a_itemsize
        if has_mask and m_q != 1:
            per_row += 2 * Lk
        tq = _pick_tq(fixed_sp, per_row)

        kernel = functools.partial(_attention_kernel, inv_temperature=inv_t,
                                   has_mask=has_mask, return_attn=return_attn)
        in_specs = [
            pl.BlockSpec((pl.Squeezed(), tq, D), lambda b, i: (b, i, 0)),
            pl.BlockSpec((pl.Squeezed(), Lk, D), lambda b, i: (b, 0, 0)),
            pl.BlockSpec((pl.Squeezed(), Lk, Dv), lambda b, i: (b, 0, 0)),
        ]
        args = [q, k, v]
        if has_mask:
            mq_blk = tq if m_q != 1 else 1
            in_specs.append(pl.BlockSpec(
                (pl.Squeezed(), mq_blk, Lk),
                lambda b, i: (b if m_b != 1 else 0, i if m_q != 1 else 0, 0)))
            args.append(mask)

        out_shapes = [jax.ShapeDtypeStruct((B, Lq, Dv), q.dtype)]
        out_specs = [pl.BlockSpec((pl.Squeezed(), tq, Dv), lambda b, i: (b, i, 0))]
        if return_attn:
            out_shapes.append(jax.ShapeDtypeStruct((B, Lq, Lk), attn_dtype))
            out_specs.append(pl.BlockSpec((pl.Squeezed(), tq, Lk), lambda b, i: (b, i, 0)))

        results = pl.pallas_call(
            kernel,
            out_shape=tuple(out_shapes),
            grid=(B, Lq // tq),
            in_specs=in_specs,
            out_specs=tuple(out_specs),
            compiler_params=pltpu.CompilerParams(
                dimension_semantics=("parallel", "parallel"),
                vmem_limit_bytes=vmem_limit),
        )(*args)
        if return_attn:
            out, attn = results
            return out, attn
        (out,) = results
        return out, None

    # ---------------- flash (Lk-tiled online softmax) path --------------------
    tk = tk_cands[0]
    fixed_fl = 2 * tk * (D + Dv) * itemsize + (2 * tk if (has_mask and m_q == 1) else 0)
    per_row = 2 * (D + Dv) * itemsize + 3 * tk * 4 + 4 * Dv + 8   # + m/l/acc scratch
    if has_mask and m_q != 1:
        per_row += 2 * tk
    tq = _pick_tq(fixed_fl, per_row)

    kernel = functools.partial(_flash_attention_kernel, inv_temperature=inv_t,
                               has_mask=has_mask)
    in_specs = [
        pl.BlockSpec((pl.Squeezed(), tq, D), lambda b, i, kj: (b, i, 0)),
        pl.BlockSpec((pl.Squeezed(), tk, D), lambda b, i, kj: (b, kj, 0)),
        pl.BlockSpec((pl.Squeezed(), tk, Dv), lambda b, i, kj: (b, kj, 0)),
    ]
    args = [q, k, v]
    if has_mask:
        mq_blk = tq if m_q != 1 else 1
        in_specs.append(pl.BlockSpec(
            (pl.Squeezed(), mq_blk, tk),
            lambda b, i, kj: (b if m_b != 1 else 0, i if m_q != 1 else 0, kj)))
        args.append(mask)

    out = pl.pallas_call(
        kernel,
        out_shape=jax.ShapeDtypeStruct((B, Lq, Dv), q.dtype),
        grid=(B, Lq // tq, Lk // tk),
        in_specs=in_specs,
        out_specs=pl.BlockSpec((pl.Squeezed(), tq, Dv), lambda b, i, kj: (b, i, 0)),
        scratch_shapes=[pltpu.VMEM((tq, 1), jnp.float32),
                        pltpu.VMEM((tq, 1), jnp.float32),
                        pltpu.VMEM((tq, Dv), jnp.float32)],
        compiler_params=pltpu.CompilerParams(
            dimension_semantics=("parallel", "parallel", "arbitrary"),
            vmem_limit_bytes=vmem_limit),
    )(*args)
    return out, None


# --------------------------------------------------------------------------
# Pure-JAX reference & tests
# --------------------------------------------------------------------------
def _reference(q, k, v, mask, temperature):
    scores = jnp.einsum("bqd,bkd->bqk", q, k) / temperature
    if mask is not None:
        scores = jnp.where(mask, -jnp.inf, scores)
    attn = jax.nn.softmax(scores, axis=2)
    out = jnp.einsum("bqk,bkd->bqd", attn, v)
    return out, attn


if __name__ == "__main__":
    key = jax.random.PRNGKey(0)

    # --- Test 1: small shapes, full-rank mask (True = masked) --------------
    B, Lq, Lk, D, Dv = 2, 8, 8, 32, 32
    temperature = float(D) ** 0.5
    kq, kk, kv = jax.random.split(key, 3)
    q = jax.random.normal(kq, (B, Lq, D), dtype=jnp.float32)
    k = jax.random.normal(kk, (B, Lk, D), dtype=jnp.float32)
    v = jax.random.normal(kv, (B, Lk, Dv), dtype=jnp.float32)
    mask = jnp.broadcast_to(jnp.arange(Lk)[None, None, :] >= Lk - 2, (B, Lq, Lk))

    out, attn = cross_attention(q, k, v, mask, temperature=temperature,
                                attn_dropout=0.0)
    jax.block_until_ready((out, attn))
    ref_out, ref_attn = _reference(q, k, v, mask, temperature)
    assert jnp.allclose(out, ref_out, atol=2e-3, rtol=2e-3)
    assert jnp.allclose(attn, ref_attn, atol=2e-3, rtol=2e-3)

    # --- Test 2: no mask (mask input/select elided in the kernel) ----------
    out_nm, attn_nm = cross_attention(q, k, v, None, temperature=temperature)
    jax.block_until_ready((out_nm, attn_nm))
    ref_out_nm, ref_attn_nm = _reference(q, k, v, None, temperature)
    assert jnp.allclose(out_nm, ref_out_nm, atol=2e-3, rtol=2e-3)
    assert jnp.allclose(attn_nm, ref_attn_nm, atol=2e-3, rtol=2e-3)

    # --- Test 3: larger shapes, key-padding mask broadcast in-kernel -------
    B2, Lq2, Lk2, D2 = 2, 512, 256, 64
    temperature2 = float(D2) ** 0.5
    kq2, kk2, kv2 = jax.random.split(jax.random.PRNGKey(1), 3)
    q2 = jax.random.normal(kq2, (B2, Lq2, D2), dtype=jnp.float32)
    k2 = jax.random.normal(kk2, (B2, Lk2, D2), dtype=jnp.float32)
    v2 = jax.random.normal(kv2, (B2, Lk2, D2), dtype=jnp.float32)
    mask2 = (jnp.arange(Lk2)[None, None, :] >= Lk2 - 16)          # (1, 1, Lk)
    mask2 = jnp.broadcast_to(mask2, (B2, 1, Lk2))                 # (B, 1, Lk)

    out2, attn2 = cross_attention(q2, k2, v2, mask2, temperature=temperature2)
    jax.block_until_ready((out2, attn2))
    ref_out2, ref_attn2 = _reference(q2, k2, v2, mask2, temperature2)
    assert jnp.allclose(out2, ref_out2, atol=2e-3, rtol=2e-3)
    assert jnp.allclose(attn2, ref_attn2, atol=2e-3, rtol=2e-3)

    # --- Test 4: long context, attn elided -> flash online-softmax path ----
    B3, Lq3, Lk3, D3 = 2, 256, 2048, 64
    temperature3 = float(D3) ** 0.5
    kq3, kk3, kv3 = jax.random.split(jax.random.PRNGKey(2), 3)
    q3 = jax.random.normal(kq3, (B3, Lq3, D3), dtype=jnp.float32)
    k3 = jax.random.normal(kk3, (B3, Lk3, D3), dtype=jnp.float32)
    v3 = jax.random.normal(kv3, (B3, Lk3, D3), dtype=jnp.float32)
    # Key-padding mask: batch 0 masks the first 600 keys (first Lk tile fully
    # masked -> exercises the online-softmax -inf guards); batch 1 masks the tail.
    kpos = jnp.arange(Lk3)[None, None, :]
    mask3 = jnp.concatenate([kpos < 600, kpos >= Lk3 - 128], axis=0)   # (B, 1, Lk)

    out3, attn3 = cross_attention(q3, k3, v3, mask3, temperature=temperature3,
                                  return_attn=False)
    jax.block_until_ready(out3)
    assert attn3 is None
    ref_out3, _ = _reference(q3, k3, v3, mask3, temperature3)
    assert jnp.allclose(out3, ref_out3, atol=2e-3, rtol=2e-3)

    print("KERNEL_OK")
</pallas_src>

<mosaic_0001>
module attributes {stable_mosaic.version = 11 : i64} {
  func.func @_attention_kernel(%arg0: i32, %arg1: i32, %arg2: memref<1x8x32xf32, #tpu.memory_space<vmem>>, %arg3: memref<1x8x32xf32, #tpu.memory_space<vmem>>, %arg4: memref<1x8x32xf32, #tpu.memory_space<vmem>>, %arg5: memref<1x8x8xi8, #tpu.memory_space<vmem>>, %arg6: memref<1x8x32xf32, #tpu.memory_space<vmem>>, %arg7: memref<1x8x8xf32, #tpu.memory_space<vmem>>) attributes {dimension_semantics = [#tpu.dimension_semantics<parallel>, #tpu.dimension_semantics<parallel>], iteration_bounds = array<i64: 2, 1>, scalar_prefetch = 0 : i64, scratch_operands = 0 : i64, tpu.core_type = #tpu.core_type<tc>, window_params = [{transform_indices = @transform_0, window_bounds = array<i64: 1, 8, 32>}, {transform_indices = @transform_1, window_bounds = array<i64: 1, 8, 32>}, {transform_indices = @transform_2, window_bounds = array<i64: 1, 8, 32>}, {transform_indices = @transform_3, window_bounds = array<i64: 1, 8, 8>}, {transform_indices = @transform_4, window_bounds = array<i64: 1, 8, 32>}, {transform_indices = @transform_5, window_bounds = array<i64: 1, 8, 8>}]} {
    %c0 = arith.constant 0 : index
    %c0_0 = arith.constant 0 : index
    %c0_1 = arith.constant 0 : index
    %0 = vector.load %arg2[%c0, %c0_0, %c0_1] : memref<1x8x32xf32, #tpu.memory_space<vmem>>, vector<1x8x32xf32>
    %1 = vector.shape_cast %0 : vector<1x8x32xf32> to vector<8x32xf32>
    %cst = arith.constant 0.176776692 : f32
    %2 = vector.broadcast %cst : f32 to vector<8x32xf32>
    %3 = arith.mulf %1, %2 : vector<8x32xf32>
    %c0_2 = arith.constant 0 : index
    %c0_3 = arith.constant 0 : index
    %c0_4 = arith.constant 0 : index
    %4 = vector.load %arg3[%c0_2, %c0_3, %c0_4] : memref<1x8x32xf32, #tpu.memory_space<vmem>>, vector<1x8x32xf32>
    %5 = vector.shape_cast %4 : vector<1x8x32xf32> to vector<8x32xf32>
    %cst_5 = arith.constant dense<0.000000e+00> : vector<8x8xf32>
    %6 = tpu.matmul %3, %5, %cst_5 {dimension_numbers = #tpu.dot_dimension_numbers<[1], [1], [0], [0], [0, 0, 1, 0], [], []>} : vector<8x32xf32>, vector<8x32xf32>, vector<8x8xf32> -> vector<8x8xf32>
    %c0_6 = arith.constant 0 : index
    %c0_7 = arith.constant 0 : index
    %c0_8 = arith.constant 0 : index
    %7 = vector.load %arg5[%c0_6, %c0_7, %c0_8] : memref<1x8x8xi8, #tpu.memory_space<vmem>>, vector<1x8x8xi8>
    %8 = vector.shape_cast %7 : vector<1x8x8xi8> to vector<8x8xi8>
    %c0_i8 = arith.constant 0 : i8
    %9 = vector.broadcast %c0_i8 : i8 to vector<8x8xi8>
    %10 = arith.cmpi ne, %8, %9 : vector<8x8xi8>
    %cst_9 = arith.constant 0xFF800000 : f32
    %11 = vector.broadcast %cst_9 : f32 to vector<8x8xf32>
    %12 = arith.select %10, %11, %6 : vector<8x8xi1>, vector<8x8xf32>
    %cst_10 = arith.constant dense<0xFF800000> : vector<8xf32>
    %13 = vector.multi_reduction <maximumf>, %12, %cst_10 [1] : vector<8x8xf32> to vector<8xf32>
    %14 = vector.shape_cast %13 : vector<8xf32> to vector<8x1xf32>
    %15 = vector.broadcast %14 : vector<8x1xf32> to vector<8x8xf32>
    %16 = arith.subf %12, %15 : vector<8x8xf32>
    %17 = math.exp %16 : vector<8x8xf32>
    %cst_11 = arith.constant dense<0.000000e+00> : vector<8xf32>
    %18 = vector.multi_reduction <add>, %17, %cst_11 [1] : vector<8x8xf32> to vector<8xf32>
    %19 = vector.shape_cast %18 : vector<8xf32> to vector<8x1xf32>
    %20 = tpu.reciprocal %19 {approx = true} : vector<8x1xf32> -> vector<8x1xf32>
    %21 = vector.broadcast %20 : vector<8x1xf32> to vector<8x8xf32>
    %22 = arith.mulf %17, %21 : vector<8x8xf32>
    %c0_12 = arith.constant 0 : index
    %c0_13 = arith.constant 0 : index
    %c0_14 = arith.constant 0 : index
    %23 = vector.load %arg4[%c0_12, %c0_13, %c0_14] : memref<1x8x32xf32, #tpu.memory_space<vmem>>, vector<1x8x32xf32>
    %24 = vector.shape_cast %23 : vector<1x8x32xf32> to vector<8x32xf32>
    %cst_15 = arith.constant dense<0.000000e+00> : vector<8x32xf32>
    %25 = tpu.matmul %22, %24, %cst_15 {dimension_numbers = #tpu.dot_dimension_numbers<[1], [0], [0], [1], [0, 0, 1, 1], [], []>} : vector<8x8xf32>, vector<8x32xf32>, vector<8x32xf32> -> vector<8x32xf32>
    %c0_16 = arith.constant 0 : index
    %c0_17 = arith.constant 0 : index
    %c0_18 = arith.constant 0 : index
    %26 = vector.load %arg6[%c0_16, %c0_17, %c0_18] : memref<1x8x32xf32, #tpu.memory_space<vmem>>, vector<1x8x32xf32>
    %27 = vector.shape_cast %26 : vector<1x8x32xf32> to vector<8x32xf32>
    %28 = vector.shape_cast %25 : vector<8x32xf32> to vector<1x8x32xf32>
    tpu.vector_store %arg6[%c0_16, %c0_17, %c0_18], %28 {strides = array<i32>} : memref<1x8x32xf32, #tpu.memory_space<vmem>>, vector<1x8x32xf32>,
    %c0_19 = arith.constant 0 : index
    %c0_20 = arith.constant 0 : index
    %c0_21 = arith.constant 0 : index
    %29 = vector.load %arg7[%c0_19, %c0_20, %c0_21] : memref<1x8x8xf32, #tpu.memory_space<vmem>>, vector<1x8x8xf32>
    %30 = vector.shape_cast %29 : vector<1x8x8xf32> to vector<8x8xf32>
    %31 = vector.shape_cast %22 : vector<8x8xf32> to vector<1x8x8xf32>
    tpu.vector_store %arg7[%c0_19, %c0_20, %c0_21], %31 {strides = array<i32>} : memref<1x8x8xf32, #tpu.memory_space<vmem>>, vector<1x8x8xf32>,
    return
  }
  func.func @transform_0(%arg0: i32, %arg1: i32) -> (i32, i32, i32) {
    %c0_i32 = arith.constant 0 : i32
    %c0_i32_0 = arith.constant 0 : i32
    return %arg0, %arg1, %c0_i32 : i32, i32, i32
  }
  func.func @transform_1(%arg0: i32, %arg1: i32) -> (i32, i32, i32) {
    %c0_i32 = arith.constant 0 : i32
    %c0_i32_0 = arith.constant 0 : i32
    %c0_i32_1 = arith.constant 0 : i32
    return %arg0, %c0_i32, %c0_i32_0 : i32, i32, i32
  }
  func.func @transform_2(%arg0: i32, %arg1: i32) -> (i32, i32, i32) {
    %c0_i32 = arith.constant 0 : i32
    %c0_i32_0 = arith.constant 0 : i32
    %c0_i32_1 = arith.constant 0 : i32
    return %arg0, %c0_i32, %c0_i32_0 : i32, i32, i32
  }
  func.func @transform_3(%arg0: i32, %arg1: i32) -> (i32, i32, i32) {
    %c0_i32 = arith.constant 0 : i32
    %c0_i32_0 = arith.constant 0 : i32
    return %arg0, %arg1, %c0_i32 : i32, i32, i32
  }
  func.func @transform_4(%arg0: i32, %arg1: i32) -> (i32, i32, i32) {
    %c0_i32 = arith.constant 0 : i32
    %c0_i32_0 = arith.constant 0 : i32
    return %arg0, %arg1, %c0_i32 : i32, i32, i32
  }
  func.func @transform_5(%arg0: i32, %arg1: i32) -> (i32, i32, i32) {
    %c0_i32 = arith.constant 0 : i32
    %c0_i32_0 = arith.constant 0 : i32
    return %arg0, %arg1, %c0_i32 : i32, i32, i32
  }
}

</mosaic_0001>

<llo_original>
// kernel: tpu_custom_call.1
$region0: #{tpu_custom_call.1}
  #allocation0 [shape = 'u32[]', space=smem, size = 0x4, offset = 0x4, fixed_abs, tag = 'smem constant byte address 0x4 - core index']
  #allocation1 [shape = 'u32[144,128]{1,0:T(1,128)}', space=vmem, size = 0x12000, scoped, tag = 'internal scratch']
  %s0 = inlined_call_operand.hbm [shape: f32[2,8,32], index: 0, kind: input, shape index: {}]
  %s1 = inlined_call_operand.hbm [shape: f32[2,8,32], index: 1, kind: input, shape index: {}]
  %s2 = inlined_call_operand.hbm [shape: f32[2,8,32], index: 2, kind: input, shape index: {}]
  %s3 = inlined_call_operand.vmem [shape: s8[2,8,8], index: 3, kind: input, shape index: {}]
  %s4 = inlined_call_operand.hbm [shape: f32[2,8,32], index: 4, kind: output, shape index: {0}]
  %s5 = inlined_call_operand.hbm [shape: f32[2,8,8], index: 5, kind: output, shape index: {1}]
  %6 = xla_tuple %s4, %s5
  %s7 = sld [smem:[#allocation0]]
  $region69: #{tpu_custom_call.1} parent=0
    _
  %s9 = ssub.s32 1, %s7
  %s10 = scalar_select 0, %s9, %s7
  $region1: #{tpu_custom_call.1} parent=0
    #allocation2 [shape = 'u8[8192]{0}', space=vmem, size = 0x2000, scoped, tag = 'input window, operand 0']
    #allocation3 [shape = 's32[2]{0}', space=sflag, size = 0x8, scoped, tag = 'scoped memory for tpu_custom_call.1']
    #allocation4 [shape = 's32[2]{0}', space=sflag, size = 0x8, scoped, tag = 'scoped memory for tpu_custom_call.1']
    #allocation5 [shape = 'u8[8192]{0}', space=vmem, size = 0x2000, scoped, tag = 'input window, operand 1']
    #allocation6 [shape = 's32[2]{0}', space=sflag, size = 0x8, scoped, tag = 'scoped memory for tpu_custom_call.1']
    #allocation7 [shape = 'u8[8192]{0}', space=vmem, size = 0x2000, scoped, tag = 'input window, operand 2']
    #allocation8 [shape = 'u8[8192]{0}', space=vmem, size = 0x2000, scoped, tag = 'output window, operand 0']
    #allocation9 [shape = 'u8[8192]{0}', space=vmem, size = 0x2000, scoped, tag = 'output window, operand 1']
    #allocation10 [shape = 's32[2]{0}', space=sflag, size = 0x8, scoped, tag = 'scoped memory for tpu_custom_call.1']
    %11 = vsyncpa [#allocation3], 0
    %s12 = scalar_lea.sflag [#allocation3], 1
    %13 = vsyncpa %s12, 0
    %14 = vsyncpa [#allocation6], 0
    %s15 = scalar_lea.sflag [#allocation6], 1
    %16 = vsyncpa %s15, 0
    %17 = vsyncpa [#allocation4], 0
    %s18 = scalar_lea.sflag [#allocation4], 1
    %19 = vsyncpa %s18, 0
    %20 = vsyncpa [#allocation10], 0
    %s21 = scalar_lea.sflag [#allocation10], 1
    %22 = vsyncpa %s21, 0
    loop: start=0, step=1, limit=4
    $region2: #{tpu_custom_call.1} parent=1 // loop_pre_header
      _
    $region3: #{tpu_custom_call.1} parent=1 // loop_header
      %s24 = sphi 0, %s28
      %p25 = scmp.ge.s32.totalorder %s24, 4
      %s31 = sphi 0, %s43
      %s32 = sphi 0, %s39
      %s33 = sphi 0, %s31
      %s34 = sphi 0, %s32
      %s35 = sphi 0, %s33
      %s36 = sphi 0, %s34
      %s48 = sphi 0, %s50
      %s51 = sphi 0, %s48
      %s52 = sphi 0, %s51
      %s68 = sphi 0, %s52
      %s74 = sphi 0, %s76
      %s77 = sphi 0, %s74
      %s78 = sphi 0, %s77
      %s94 = sphi 0, %s78
      %s100 = sphi 0, %s102
      %s103 = sphi 0, %s100
      %s104 = sphi 0, %s103
      %s120 = sphi 0, %s104
      %s128 = sphi 0, %s130
      %s131 = sphi 0, %s128
      %s132 = sphi 0, %s131
      %s148 = sphi 0, %s132
      %s156 = sphi 0, %s158
      %s159 = sphi 0, %s156
      %s160 = sphi 0, %s159
      %s176 = sphi 0, %s160
      %s184 = sphi 0, %s186
      %s187 = sphi 0, %s184
      %s188 = sphi 0, %s187
      %s204 = sphi 0, %s188
    $region4: #{tpu_custom_call.1} parent=1 // loop_header_branch
      %27 = sbr.rel (%p25) target = $region8
    $region5: #{tpu_custom_call.1} parent=1 // loop_body
      %s29 = ssub.s32 %s24, 1
      %s30 = ssub.s32 %s24, 2
      %s37 = sadd.s32 1, %s32
      %p38 = scmp.ge.s32.totalorder %s37, 1
      %s39 = scalar_select %p38, 0, %s37
      %s40 = sadd.s32 1, %s31
      %s41 = scalar_select %p38, %s40, %s31
      %p42 = scmp.ge.s32.totalorder %s41, 2
      %s43 = scalar_select %p42, 0, %s41
      %s44 = ssub.s32 %s31, %s43
      %s45 = ssub.s32 %s32, %s39
      %s46 = sor.u32 %s44, %s45
      %p47 = scmp.eq.s32.totalorder %s46, 0
      %s49 = sadd.s32 %s48, 1
      %s50 = scalar_select %p47, %s48, %s49
      %p53 = pneg %p47
      %p54 = scmp.eq.s32.totalorder %s24, 1
      %p55 = por %p53, %p54
      %p56 = scmp.ne.s32.totalorder %s48, %s51
      %p57 = scmp.eq.s32.totalorder %s24, 0
      %p58 = por %p56, %p57
      %p59 = scmp.ne.s32.totalorder %s48, %s51
      %p60 = scmp.eq.s32.totalorder %s29, 1
      %p61 = por %p59, %p60
      %p62 = scmp.ne.s32.totalorder %s51, %s52
      %p63 = scmp.eq.s32.totalorder %s29, 0
      %p64 = por %p62, %p63
      %p65 = scmp.ne.s32.totalorder %s51, %s52
      %p66 = scmp.eq.s32.totalorder %s30, 1
      %p67 = por %p65, %p66
      %p69 = scmp.ne.s32.totalorder %s52, %s68
      %p70 = scmp.eq.s32.totalorder %s30, 0
      %p71 = por %p69, %p70
      %s72 = ssub.s32 %s31, %s43
      %p73 = scmp.eq.s32.totalorder %s72, 0
      %s75 = sadd.s32 %s74, 1
      %s76 = scalar_select %p73, %s74, %s75
      %p79 = pneg %p73
      %p80 = scmp.eq.s32.totalorder %s24, 1
      %p81 = por %p79, %p80
      %p82 = scmp.ne.s32.totalorder %s74, %s77
      %p83 = scmp.eq.s32.totalorder %s24, 0
      %p84 = por %p82, %p83
      %p85 = scmp.ne.s32.totalorder %s74, %s77
      %p86 = scmp.eq.s32.totalorder %s29, 1
      %p87 = por %p85, %p86
      %p88 = scmp.ne.s32.totalorder %s77, %s78
      %p89 = scmp.eq.s32.totalorder %s29, 0
      %p90 = por %p88, %p89
      %p91 = scmp.ne.s32.totalorder %s77, %s78
      %p92 = scmp.eq.s32.totalorder %s30, 1
      %p93 = por %p91, %p92
      %p95 = scmp.ne.s32.totalorder %s78, %s94
      %p96 = scmp.eq.s32.totalorder %s30, 0
      %p97 = por %p95, %p96
      %s98 = ssub.s32 %s31, %s43
      %p99 = scmp.eq.s32.totalorder %s98, 0
      %s101 = sadd.s32 %s100, 1
      %s102 = scalar_select %p99, %s100, %s101
      %p105 = pneg %p99
      %p106 = scmp.eq.s32.totalorder %s24, 1
      %p107 = por %p105, %p106
      %p108 = scmp.ne.s32.totalorder %s100, %s103
      %p109 = scmp.eq.s32.totalorder %s24, 0
      %p110 = por %p108, %p109
      %p111 = scmp.ne.s32.totalorder %s100, %s103
      %p112 = scmp.eq.s32.totalorder %s29, 1
      %p113 = por %p111, %p112
      %p114 = scmp.ne.s32.totalorder %s103, %s104
      %p115 = scmp.eq.s32.totalorder %s29, 0
      %p116 = por %p114, %p115
      %p117 = scmp.ne.s32.totalorder %s103, %s104
      %p118 = scmp.eq.s32.totalorder %s30, 1
      %p119 = por %p117, %p118
      %p121 = scmp.ne.s32.totalorder %s104, %s120
      %p122 = scmp.eq.s32.totalorder %s30, 0
      %p123 = por %p121, %p122
      %s124 = ssub.s32 %s31, %s43
      %s125 = ssub.s32 %s32, %s39
      %s126 = sor.u32 %s124, %s125
      %p127 = scmp.eq.s32.totalorder %s126, 0
      %s129 = sadd.s32 %s128, 1
      %s130 = scalar_select %p127, %s128, %s129
      %p133 = pneg %p127
      %p134 = scmp.eq.s32.totalorder %s24, 1
      %p135 = por %p133, %p134
      %p136 = scmp.ne.s32.totalorder %s128, %s131
      %p137 = scmp.eq.s32.totalorder %s24, 0
      %p138 = por %p136, %p137
      %p139 = scmp.ne.s32.totalorder %s128, %s131
      %p140 = scmp.eq.s32.totalorder %s29, 1
      %p141 = por %p139, %p140
      %p142 = scmp.ne.s32.totalorder %s131, %s132
      %p143 = scmp.eq.s32.totalorder %s29, 0
      %p144 = por %p142, %p143
      %p145 = scmp.ne.s32.totalorder %s131, %s132
      %p146 = scmp.eq.s32.totalorder %s30, 1
      %p147 = por %p145, %p146
      %p149 = scmp.ne.s32.totalorder %s132, %s148
      %p150 = scmp.eq.s32.totalorder %s30, 0
      %p151 = por %p149, %p150
      %s152 = ssub.s32 %s31, %s43
      %s153 = ssub.s32 %s32, %s39
      %s154 = sor.u32 %s152, %s153
      %p155 = scmp.eq.s32.totalorder %s154, 0
      %s157 = sadd.s32 %s156, 1
      %s158 = scalar_select %p155, %s156, %s157
      %p161 = pneg %p155
      %p162 = scmp.eq.s32.totalorder %s24, 1
      %p163 = por %p161, %p162
      %p164 = scmp.ne.s32.totalorder %s156, %s159
      %p165 = scmp.eq.s32.totalorder %s24, 0
      %p166 = por %p164, %p165
      %p167 = scmp.ne.s32.totalorder %s156, %s159
      %p168 = scmp.eq.s32.totalorder %s29, 1
      %p169 = por %p167, %p168
      %p170 = scmp.ne.s32.totalorder %s159, %s160
      %p171 = scmp.eq.s32.totalorder %s29, 0
      %p172 = por %p170, %p171
      %p173 = scmp.ne.s32.totalorder %s159, %s160
      %p174 = scmp.eq.s32.totalorder %s30, 1
      %p175 = por %p173, %p174
      %p177 = scmp.ne.s32.totalorder %s160, %s176
      %p178 = scmp.eq.s32.totalorder %s30, 0
      %p179 = por %p177, %p178
      %s180 = ssub.s32 %s31, %s43
      %s181 = ssub.s32 %s32, %s39
      %s182 = sor.u32 %s180, %s181
      %p183 = scmp.eq.s32.totalorder %s182, 0
      %s185 = sadd.s32 %s184, 1
      %s186 = scalar_select %p183, %s184, %s185
      %p189 = pneg %p183
      %p190 = scmp.eq.s32.totalorder %s24, 1
      %p191 = por %p189, %p190
      %p192 = scmp.ne.s32.totalorder %s184, %s187
      %p193 = scmp.eq.s32.totalorder %s24, 0
      %p194 = por %p192, %p193
      %p195 = scmp.ne.s32.totalorder %s184, %s187
      %p196 = scmp.eq.s32.totalorder %s29, 1
      %p197 = por %p195, %p196
      %p198 = scmp.ne.s32.totalorder %s187, %s188
      %p199 = scmp.eq.s32.totalorder %s29, 0
      %p200 = por %p198, %p199
      %p201 = scmp.ne.s32.totalorder %s187, %s188
      %p202 = scmp.eq.s32.totalorder %s30, 1
      %p203 = por %p201, %p202
      %p205 = scmp.ne.s32.totalorder %s188, %s204
      %p206 = scmp.eq.s32.totalorder %s30, 0
      %p207 = por %p205, %p206
      %p208 = scmp.le.s32.totalorder 1, %s24
      %p209 = scmp.lt.s32.totalorder %s24, 3
      %p210 = pnand %p208, %p209
      %p211 = pneg %p210
      // Predicated region
      $region9: #{tpu_custom_call.1} parent=5 // pred_check
        _
      $region10: #{tpu_custom_call.1} parent=5 // pred_check_branch
        %213 = sbr.rel (%p210) target = $region12
      $region11: #{tpu_custom_call.1} parent=5 // pred_region
        %s214 = ssub.s32 %s24, 1
      $region12: #{tpu_custom_call.1} parent=5 // pred_fallthru
        _
      %p215 = scmp.lt.s32.totalorder %s24, 2
      // Predicated region
      $region13: #{tpu_custom_call.1} parent=5 // pred_check
        %p216 = pneg %p215
      $region14: #{tpu_custom_call.1} parent=5 // pred_check_branch
        %218 = sbr.rel (%p216) target = $region16
      $region15: #{tpu_custom_call.1} parent=5 // pred_region
        // Predicated region
        $region17: #{tpu_custom_call.1} parent=15 // pred_check
          %p219 = pneg %p58
        $region18: #{tpu_custom_call.1} parent=15 // pred_check_branch
          %221 = sbr.rel (%p219) target = $region20
        $region19: #{tpu_custom_call.1} parent=15 // pred_region
          %s222 = sand.u32 %s48, 1
          %s223 = scalar_lea.sflag [#allocation3], %s222
          %s224 = sand.u32 %s48, 1
          %s225 = smul.addr %s224, 8
          %s226 = scalar_lea.vmem [#allocation2], %s225
          %s228 = ssub.s32 128, 128
          %229 = vsyncadd %s223, %s228
          %s230 = sadd.s32 %s32, %s31
          %s231 = smul.addr %s230, 128
          %s232 = scalar_lea.hbm %s0, %s231
          %s234 = sshll.u32 %s226, 4
          %s235 = int_to_ptr.vmem [resolvable:$true] %s234
          %237 = dma.hbm_to_vmem [thread:$0]  %s232, 128, %s235, %s223
        $region20: #{tpu_custom_call.1} parent=15 // pred_fallthru
          _
        // Predicated region
        $region21: #{tpu_custom_call.1} parent=15 // pred_check
          %p238 = pneg %p84
        $region22: #{tpu_custom_call.1} parent=15 // pred_check_branch
          %240 = sbr.rel (%p238) target = $region24
        $region23: #{tpu_custom_call.1} parent=15 // pred_region
          %s241 = sand.u32 %s24, 1
          %s242 = scalar_lea.sflag [#allocation6], %s241
          %s243 = sand.u32 %s74, 1
          %s244 = smul.addr %s243, 8
          %s245 = scalar_lea.vmem [#allocation5], %s244
          %s247 = ssub.s32 128, 128
          %248 = vsyncadd %s242, %s247
          %s249 = smul.addr %s31, 128
          %s250 = scalar_lea.hbm %s1, %s249
          %s252 = sshll.u32 %s245, 4
          %s253 = int_to_ptr.vmem [resolvable:$true] %s252
          %255 = dma.hbm_to_vmem [thread:$0]  %s250, 128, %s253, %s242
        $region24: #{tpu_custom_call.1} parent=15 // pred_fallthru
          _
        // Predicated region
        $region25: #{tpu_custom_call.1} parent=15 // pred_check
          %p256 = pneg %p110
        $region26: #{tpu_custom_call.1} parent=15 // pred_check_branch
          %258 = sbr.rel (%p256) target = $region28
        $region27: #{tpu_custom_call.1} parent=15 // pred_region
          %s259 = sand.u32 %s24, 1
          %s260 = scalar_lea.sflag [#allocation6], %s259
          %s261 = sand.u32 %s100, 1
          %s262 = smul.addr %s261, 8
          %s263 = scalar_lea.vmem [#allocation7], %s262
          %s265 = ssub.s32 128, 128
          %266 = vsyncadd %s260, %s265
          %s267 = smul.addr %s31, 128
          %s268 = scalar_lea.hbm %s2, %s267
          %s270 = sshll.u32 %s263, 4
          %s271 = int_to_ptr.vmem [resolvable:$true] %s270
          %273 = dma.hbm_to_vmem [thread:$0]  %s268, 128, %s271, %s260
        $region28: #{tpu_custom_call.1} parent=15 // pred_fallthru
          _
        // Predicated region
        $region29: #{tpu_custom_call.1} parent=15 // pred_check
          %p274 = pneg %p138
        $region30: #{tpu_custom_call.1} parent=15 // pred_check_branch
          %276 = sbr.rel (%p274) target = $region32
        $region31: #{tpu_custom_call.1} parent=15 // pred_region
          %p277 = scmp.lt.s32.totalorder %s31, 1
          %s278 = scalar_select %p277, %s31, 1
          %p279 = scmp.lt.s32.totalorder %s32, 0
          %s280 = scalar_select %p279, %s32, 0
          %s281 = sadd.s32 %s280, %s278
          %s282 = smul.addr %s281, 2
          %s283 = scalar_lea.vmem %s3, %s282
        $region32: #{tpu_custom_call.1} parent=15 // pred_fallthru
          _
      $region16: #{tpu_custom_call.1} parent=5 // pred_fallthru
        _
      %p284 = scmp.le.s32.totalorder 1, %s24
      %p285 = scmp.lt.s32.totalorder %s24, 3
      %p286 = pnand %p284, %p285
      %p287 = pneg %p286
      // Predicated region
      $region33: #{tpu_custom_call.1} parent=5 // pred_check
        _
      $region34: #{tpu_custom_call.1} parent=5 // pred_check_branch
        %289 = sbr.rel (%p286) target = $region36
      $region35: #{tpu_custom_call.1} parent=5 // pred_region
        %s290 = ssub.s32 %s24, 1
        %s291 = sand.u32 %s51, 1
        %s292 = scalar_lea.sflag [#allocation3], %s291
        %s293 = sand.u32 %s51, 1
        %s294 = smul.addr %s293, 8
        %s295 = scalar_lea.vmem [#allocation2], %s294
        // Predicated region
        $region37: #{tpu_custom_call.1} parent=35 // pred_check
          %p296 = pneg %p64
        $region38: #{tpu_custom_call.1} parent=35 // pred_check_branch
          %298 = sbr.rel (%p296) target = $region40
        $region39: #{tpu_custom_call.1} parent=35 // pred_region
          %299 = dma.done %s292, 128
        $region40: #{tpu_custom_call.1} parent=35 // pred_fallthru
          _
        %s300 = sand.u32 %s29, 1
        %s301 = scalar_lea.sflag [#allocation6], %s300
        %s302 = sand.u32 %s77, 1
        %s303 = smul.addr %s302, 8
        %s304 = scalar_lea.vmem [#allocation5], %s303
        // Predicated region
        $region41: #{tpu_custom_call.1} parent=35 // pred_check
          %p305 = pneg %p90
        $region42: #{tpu_custom_call.1} parent=35 // pred_check_branch
          %307 = sbr.rel (%p305) target = $region44
        $region43: #{tpu_custom_call.1} parent=35 // pred_region
          %308 = dma.done %s301, 128
        $region44: #{tpu_custom_call.1} parent=35 // pred_fallthru
          _
        %s309 = sand.u32 %s29, 1
        %s310 = scalar_lea.sflag [#allocation6], %s309
        %s311 = sand.u32 %s103, 1
        %s312 = smul.addr %s311, 8
        %s313 = scalar_lea.vmem [#allocation7], %s312
        // Predicated region
        $region45: #{tpu_custom_call.1} parent=35 // pred_check
          %p314 = pneg %p116
        $region46: #{tpu_custom_call.1} parent=35 // pred_check_branch
          %316 = sbr.rel (%p314) target = $region48
        $region47: #{tpu_custom_call.1} parent=35 // pred_region
          %317 = dma.done %s310, 128
        $region48: #{tpu_custom_call.1} parent=35 // pred_fallthru
          _
        %s318 = sand.u32 %s51, 1
        %s319 = scalar_lea.sflag [#allocation3], %s318
        %s320 = sand.u32 %s51, 1
        %s321 = smul.addr %s320, 8
        %s322 = scalar_lea.vmem [#allocation2], %s321
        %p323 = pneg %p64
        %p324 = pneg %p61
        %s325 = sand.u32 %s29, 1
        %s326 = scalar_lea.sflag [#allocation6], %s325
        %s327 = sand.u32 %s77, 1
        %s328 = smul.addr %s327, 8
        %s329 = scalar_lea.vmem [#allocation5], %s328
        %p330 = pneg %p90
        %p331 = pneg %p87
        %s332 = sand.u32 %s29, 1
        %s333 = scalar_lea.sflag [#allocation6], %s332
        %s334 = sand.u32 %s103, 1
        %s335 = smul.addr %s334, 8
        %s336 = scalar_lea.vmem [#allocation7], %s335
        %p337 = pneg %p116
        %p338 = pneg %p113
        %p339 = scmp.lt.s32.totalorder %s33, 1
        %s340 = scalar_select %p339, %s33, 1
        %p341 = scmp.lt.s32.totalorder %s34, 0
        %s342 = scalar_select %p341, %s34, 0
        %s343 = sadd.s32 %s342, %s340
        %s344 = smul.addr %s343, 2
        %s345 = scalar_lea.vmem %s3, %s344
        %p346 = pneg %p144
        %p347 = pneg %p141
        %p348 = pneg %p172
        %p349 = pneg %p169
        %s350 = sand.u32 %s159, 1
        %s351 = scalar_lea.sflag [#allocation4], %s350
        %s352 = sand.u32 %s159, 1
        %s353 = smul.addr %s352, 8
        %s354 = scalar_lea.vmem [#allocation8], %s353
        %p355 = pneg %p200
        %p356 = pneg %p197
        %s357 = sand.u32 %s187, 1
        %s358 = scalar_lea.sflag [#allocation10], %s357
        %s359 = sand.u32 %s187, 1
        %s360 = smul.addr %s359, 8
        %s361 = scalar_lea.vmem [#allocation9], %s360
        %p362 = scmp.lt.s32.totalorder %s33, 1
        %s363 = scalar_select %p362, %s33, 1
        %p364 = scmp.lt.s32.totalorder %s34, 0
        %s365 = scalar_select %p364, %s34, 0
        %s366 = sadd.s32 %s365, %s363
        %s367 = smul.addr %s366, 2
        %s368 = scalar_lea.vmem %s3, %s367
        %v371 = vld [vmem:[%s295] sm:$0xff]
        %v372 = vmul.f32 %v371, 0.17677669
        %v373 = vld [vmem:[%s304] sm:$0xff]
        %vm374 = vcmask 261120
        %v376 = vsel %vm374, %v372, 0
        %v379 = vsel %vm374, %v373, 0
        %381 = vmatprep.subr.mxu0 0.0
        %382 = vmatpush1.xpose.msra.mxu0 0.0
        %383 = vmatprep.subr.mxu0 0.0
        %384 = vmatpush1.xpose.msra.mxu0 0.0
        %385 = vmatprep.subr.mxu0 0.0
        %386 = vmatpush1.xpose.msra.mxu0 0.0
        %387 = vmatprep.subr.mxu0 0.0
        %388 = vmatpush1.xpose.msra.mxu0 0.0
        %389 = vmatprep.subr.mxu0 0.0
        %390 = vmatpush1.xpose.msra.mxu0 0.0
        %391 = vmatprep.subr.mxu0 0.0
        %392 = vmatpush1.xpose.msra.mxu0 0.0
        %393 = vmatprep.subr.mxu0 0.0
        %394 = vmatpush1.xpose.msra.mxu0 0.0
        %395 = vmatprep.subr.mxu0 0.0
        %396 = vmatpush1.xpose.msra.mxu0 0.0
        %397 = vmatprep.subr.mxu0 0.0
        %398 = vmatpush1.xpose.msra.mxu0 0.0
        %399 = vmatprep.subr.mxu0 0.0
        %400 = vmatpush1.xpose.msra.mxu0 0.0
        %401 = vmatprep.subr.mxu0 0.0
        %402 = vmatpush1.xpose.msra.mxu0 0.0
        %403 = vmatprep.subr.mxu0 0.0
        %404 = vmatpush1.xpose.msra.mxu0 0.0
        %405 = vmatprep.subr.mxu0 0.0
        %406 = vmatpush1.xpose.msra.mxu0 0.0
        %407 = vmatprep.subr.mxu0 0.0
        %408 = vmatpush1.xpose.msra.mxu0 0.0
        %409 = vmatprep.subr.mxu0 0.0
        %410 = vmatpush1.xpose.msra.mxu0 0.0
        %411 = vmatprep.subr.mxu0 0.0
        %412 = vmatpush1.xpose.msra.mxu0 %v379
        %413 = vmatprep.subr.mxu0 0.0
        %414 = vmatpush2.xpose.msra.mxu0 0.0
        %415 = vmatprep.subr.mxu0 0.0
        %416 = vmatpush2.xpose.msra.mxu0 0.0
        %417 = vmatprep.subr.mxu0 0.0
        %418 = vmatpush2.xpose.msra.mxu0 0.0
        %419 = vmatprep.subr.mxu0 0.0
        %420 = vmatpush2.xpose.msra.mxu0 0.0
        %421 = vmatprep.subr.mxu0 0.0
        %422 = vmatpush2.xpose.msra.mxu0 0.0
        %423 = vmatprep.subr.mxu0 0.0
        %424 = vmatpush2.xpose.msra.mxu0 0.0
        %425 = vmatprep.subr.mxu0 0.0
        %426 = vmatpush2.xpose.msra.mxu0 0.0
        %427 = vmatprep.subr.mxu0 0.0
        %428 = vmatpush2.xpose.msra.mxu0 0.0
        %429 = vmatprep.subr.mxu0 0.0
        %430 = vmatpush2.xpose.msra.mxu0 0.0
        %431 = vmatprep.subr.mxu0 0.0
        %432 = vmatpush2.xpose.msra.mxu0 0.0
        %433 = vmatprep.subr.mxu0 0.0
        %434 = vmatpush2.xpose.msra.mxu0 0.0
        %435 = vmatprep.subr.mxu0 0.0
        %436 = vmatpush2.xpose.msra.mxu0 0.0
        %437 = vmatprep.subr.mxu0 0.0
        %438 = vmatpush2.xpose.msra.mxu0 0.0
        %439 = vmatprep.subr.mxu0 0.0
        %440 = vmatpush2.xpose.msra.mxu0 0.0
        %441 = vmatprep.subr.mxu0 0.0
        %442 = vmatpush2.xpose.msra.mxu0 0.0
        %443 = vmatprep.subr.mxu0 0.0
        %444 = vmatpush2.xpose.msra.mxu0 0.0
        %445 = vmatprep.mubr.f32.mxu0 0.0
        %446 = vmatmul.mubr.f32.gmra.mxu0 %v376
        %v447 = vpop.f32.mrf.mxu0
        %v448 = vadd.f32 0.0, %v447
        %v449 = vpop.f32.mrf.mxu0
        %450 = vdwg.mxu0
        %v451 = vld [vmem:[%s368] sm:$0x3]
        %vm452 = vnez %v451
        %v453 = vsel %vm452, 16843009, 0
        %v454 = vunpack.c.0.s8 %v453
        %vm455 = vcmp.ne.s32.totalorder %v454, 0
        %v456 = vsel %vm455, -inf, %v448
        %vm457 = vcmask 64512
        %v458 = vsel %vm457, %v456, -inf
        %459 = vmax.xlane.f32.xlu0 %v458
        %v460 = vpop.xlane.xlu0 %459
        %v461 = vsub.f32 %v456, %v460
        %v462 = vmul.f32 %v461, 1.442695
        %v463 = vpow.pop %v462
        %v464 = vsel %vm457, %v463, 0.0
        %465 = vadd.xlane.f32.xlu0 %v464
        %v466 = vpop.xlane.xlu0 %465
        %v467 = vrcp.pop %v466
        %v468 = vmul.f32 %v463, %v467
        %v469 = vld [vmem:[%s313] sm:$0xff]
        %v471 = vsel %vm457, %v468, 0
        %473 = vmatprep.subr.mxu0 0.0
        %474 = vmatpush1.msra.mxu0 0.0
        %475 = vmatprep.subr.mxu0 0.0
        %476 = vmatpush1.msra.mxu0 0.0
        %477 = vmatprep.subr.mxu0 0.0
        %478 = vmatpush1.msra.mxu0 0.0
        %479 = vmatprep.subr.mxu0 0.0
        %480 = vmatpush1.msra.mxu0 0.0
        %481 = vmatprep.subr.mxu0 0.0
        %482 = vmatpush1.msra.mxu0 0.0
        %483 = vmatprep.subr.mxu0 0.0
        %484 = vmatpush1.msra.mxu0 0.0
        %485 = vmatprep.subr.mxu0 0.0
        %486 = vmatpush1.msra.mxu0 0.0
        %487 = vmatprep.subr.mxu0 0.0
        %488 = vmatpush1.msra.mxu0 0.0
        %489 = vmatprep.subr.mxu0 0.0
        %490 = vmatpush1.msra.mxu0 0.0
        %491 = vmatprep.subr.mxu0 0.0
        %492 = vmatpush1.msra.mxu0 0.0
        %493 = vmatprep.subr.mxu0 0.0
        %494 = vmatpush1.msra.mxu0 0.0
        %495 = vmatprep.subr.mxu0 0.0
        %496 = vmatpush1.msra.mxu0 0.0
        %497 = vmatprep.subr.mxu0 0.0
        %498 = vmatpush1.msra.mxu0 0.0
        %499 = vmatprep.subr.mxu0 0.0
        %500 = vmatpush1.msra.mxu0 0.0
        %501 = vmatprep.subr.mxu0 0.0
        %502 = vmatpush1.msra.mxu0 0.0
        %503 = vmatprep.subr.mxu0 0.0
        %504 = vmatpush1.msra.mxu0 %v469
        %505 = vmatprep.subr.mxu0 0.0
        %506 = vmatpush2.msra.mxu0 0.0
        %507 = vmatprep.subr.mxu0 0.0
        %508 = vmatpush2.msra.mxu0 0.0
        %509 = vmatprep.subr.mxu0 0.0
        %510 = vmatpush2.msra.mxu0 0.0
        %511 = vmatprep.subr.mxu0 0.0
        %512 = vmatpush2.msra.mxu0 0.0
        %513 = vmatprep.subr.mxu0 0.0
        %514 = vmatpush2.msra.mxu0 0.0
        %515 = vmatprep.subr.mxu0 0.0
        %516 = vmatpush2.msra.mxu0 0.0
        %517 = vmatprep.subr.mxu0 0.0
        %518 = vmatpush2.msra.mxu0 0.0
        %519 = vmatprep.subr.mxu0 0.0
        %520 = vmatpush2.msra.mxu0 0.0
        %521 = vmatprep.subr.mxu0 0.0
        %522 = vmatpush2.msra.mxu0 0.0
        %523 = vmatprep.subr.mxu0 0.0
        %524 = vmatpush2.msra.mxu0 0.0
        %525 = vmatprep.subr.mxu0 0.0
        %526 = vmatpush2.msra.mxu0 0.0
        %527 = vmatprep.subr.mxu0 0.0
        %528 = vmatpush2.msra.mxu0 0.0
        %529 = vmatprep.subr.mxu0 0.0
        %530 = vmatpush2.msra.mxu0 0.0
        %531 = vmatprep.subr.mxu0 0.0
        %532 = vmatpush2.msra.mxu0 0.0
        %533 = vmatprep.subr.mxu0 0.0
        %534 = vmatpush2.msra.mxu0 0.0
        %535 = vmatprep.subr.mxu0 0.0
        %536 = vmatpush2.msra.mxu0 0.0
        %537 = vmatprep.mubr.f32.mxu0 0.0
        %538 = vmatmul.mubr.f32.gmra.mxu0 %v471
        %v539 = vpop.f32.mrf.mxu0
        %v540 = vadd.f32 0.0, %v539
        %v541 = vpop.f32.mrf.mxu0
        %542 = vdwg.mxu0
        %543 = vst.msk [vmem:[%s354] sm:$0xff] %vm374, %v540
        %544 = vst.msk [vmem:[%s361] sm:$0xff] %vm457, %v468
        %s545 = sand.u32 %s159, 1
        %s546 = scalar_lea.sflag [#allocation4], %s545
        %s547 = sand.u32 %s159, 1
        %s548 = smul.addr %s547, 8
        %s549 = scalar_lea.vmem [#allocation8], %s548
        %s550 = sand.u32 %s187, 1
        %s551 = scalar_lea.sflag [#allocation10], %s550
        %s552 = sand.u32 %s187, 1
        %s553 = smul.addr %s552, 8
        %s554 = scalar_lea.vmem [#allocation9], %s553
        // Predicated region
        $region49: #{tpu_custom_call.1} parent=35 // pred_check
          %p555 = pneg %p169
        $region50: #{tpu_custom_call.1} parent=35 // pred_check_branch
          %557 = sbr.rel (%p555) target = $region52
        $region51: #{tpu_custom_call.1} parent=35 // pred_region
          %s559 = ssub.s32 128, 128
          %560 = vsyncadd %s546, %s559
          %s561 = sadd.s32 %s34, %s33
          %s562 = smul.addr %s561, 128
          %s563 = scalar_lea.hbm %s4, %s562
          %s565 = sshll.u32 %s549, 4
          %s566 = int_to_ptr.vmem [resolvable:$true] %s565
          %568 = dma.vmem_to_hbm [thread:$0]  %s566, 128, %s563, %s546
        $region52: #{tpu_custom_call.1} parent=35 // pred_fallthru
          _
        // Predicated region
        $region53: #{tpu_custom_call.1} parent=35 // pred_check
          %p569 = pneg %p197
        $region54: #{tpu_custom_call.1} parent=35 // pred_check_branch
          %571 = sbr.rel (%p569) target = $region56
        $region55: #{tpu_custom_call.1} parent=35 // pred_region
          %s573 = ssub.s32 128, 128
          %574 = vsyncadd %s551, %s573
          %s575 = sadd.s32 %s34, %s33
          %s576 = smul.addr %s575, 128
          %s577 = scalar_lea.hbm %s5, %s576
          %s579 = sshll.u32 %s554, 4
          %s580 = int_to_ptr.vmem [resolvable:$true] %s579
          %582 = dma.vmem_to_hbm [thread:$0]  %s580, 128, %s577, %s551
        $region56: #{tpu_custom_call.1} parent=35 // pred_fallthru
          _
      $region36: #{tpu_custom_call.1} parent=5 // pred_fallthru
        _
      %p583 = scmp.le.s32.totalorder 2, %s24
      // Predicated region
      $region57: #{tpu_custom_call.1} parent=5 // pred_check
        %p584 = pneg %p583
      $region58: #{tpu_custom_call.1} parent=5 // pred_check_branch
        %586 = sbr.rel (%p584) target = $region60
      $region59: #{tpu_custom_call.1} parent=5 // pred_region
        %s587 = ssub.s32 %s24, 2
        // Predicated region
        $region61: #{tpu_custom_call.1} parent=59 // pred_check
          %p588 = pneg %p175
        $region62: #{tpu_custom_call.1} parent=59 // pred_check_branch
          %590 = sbr.rel (%p588) target = $region64
        $region63: #{tpu_custom_call.1} parent=59 // pred_region
          %s591 = sand.u32 %s160, 1
          %s592 = scalar_lea.sflag [#allocation4], %s591
          %s593 = sand.u32 %s160, 1
          %s594 = smul.addr %s593, 8
          %s595 = scalar_lea.vmem [#allocation8], %s594
          %596 = dma.done %s592, 128
        $region64: #{tpu_custom_call.1} parent=59 // pred_fallthru
          _
        // Predicated region
        $region65: #{tpu_custom_call.1} parent=59 // pred_check
          %p597 = pneg %p203
        $region66: #{tpu_custom_call.1} parent=59 // pred_check_branch
          %599 = sbr.rel (%p597) target = $region68
        $region67: #{tpu_custom_call.1} parent=59 // pred_region
          %s600 = sand.u32 %s188, 1
          %s601 = scalar_lea.sflag [#allocation10], %s600
          %s602 = sand.u32 %s188, 1
          %s603 = smul.addr %s602, 8
          %s604 = scalar_lea.vmem [#allocation9], %s603
          %605 = dma.done %s601, 128
        $region68: #{tpu_custom_call.1} parent=59 // pred_fallthru
          _
      $region60: #{tpu_custom_call.1} parent=5 // pred_fallthru
        _
    $region6: #{tpu_custom_call.1} parent=1 // loop_footer
      %s28 = sadd.s32 1, %s24
    $region7: #{tpu_custom_call.1} parent=1 // loop_footer_branch
      %23 = sbr.rel target = $region3
    $region8: #{tpu_custom_call.1} parent=1 // loop_exit
      _
    %606 = vsyncpa [#allocation3], 1
    %s607 = scalar_lea.sflag [#allocation3], 1
    %608 = vsyncpa %s607, 1
    %609 = vsyncpa [#allocation6], 1
    %s610 = scalar_lea.sflag [#allocation6], 1
    %611 = vsyncpa %s610, 1
    %612 = vsyncpa [#allocation4], 1
    %s613 = scalar_lea.sflag [#allocation4], 1
    %614 = vsyncpa %s613, 1
    %615 = vsyncpa [#allocation10], 1
    %s616 = scalar_lea.sflag [#allocation10], 1
    %617 = vsyncpa %s616, 1

</llo_original>
